<compile_context>
chip_gen: v5e
topology: v5e:2x2
jax: 0.10.0
libtpu: 0.0.40
codegen_flags: <defaults>
</compile_context>

<pallas_src>
import functools

import numpy as np
import jax
import jax.numpy as jnp
from jax.experimental import pallas as pl
from jax.experimental.pallas import tpu as pltpu


def basic_block_kernel(x_ref, w1_ref, b1_ref, w2_ref, b2_ref, o_ref,
                       pad1, pad2, *, Nb, H, compute_dtype):
    WCin = pad1.shape[-1]
    WC = pad2.shape[-1]
    cdt = compute_dtype

    # Zero the per-image 1-row top/bottom halos.  Interior rows are fully overwritten every
    # step; doing this unconditionally (4 small row stores) keeps the kernel megacore-safe.
    pad1[:, 0:1, :] = jnp.zeros((Nb, 1, WCin), cdt)
    pad1[:, H + 1:H + 2, :] = jnp.zeros((Nb, 1, WCin), cdt)
    pad2[:, 0:1, :] = jnp.zeros((Nb, 1, WC), cdt)
    pad2[:, H + 1:H + 2, :] = jnp.zeros((Nb, 1, WC), cdt)

    # Interior = input, cast once to compute dtype (scratch is compute-dtype).
    pad1[:, 1:H + 1, :] = x_ref[...].astype(cdt)

    def fused_conv(pad, w_ref):
        # LHS [Nb*H, 3*WC']: the three vertically-shifted tap views concatenated along the
        # (128-aligned) lane axis -> a single K = 3*W*Cin matmul per conv.
        wci = pad.shape[-1]
        lhs = jnp.concatenate(
            [pad[:, 0:H, :], pad[:, 1:H + 1, :], pad[:, 2:H + 2, :]], axis=-1
        ).reshape(Nb * H, 3 * wci)
        return jnp.dot(lhs, w_ref[...], preferred_element_type=jnp.float32)

    # ---- conv1 (+ folded BN1 scale) -> BN1 bias -> ReLU ----
    h1 = jnp.maximum(fused_conv(pad1, w1_ref) + b1_ref[...], 0.0)      # [Nb*H, WC] f32
    pad2[:, 1:H + 1, :] = h1.reshape(Nb, H, WC).astype(cdt)

    # ---- conv2 (+ folded BN2 scale) -> BN2 bias -> residual -> ReLU ----
    acc2 = fused_conv(pad2, w2_ref) + b2_ref[...]
    res = x_ref[...].astype(jnp.float32).reshape(Nb * H, WC)           # identity shortcut
    o_ref[...] = jnp.maximum(acc2 + res, 0.0).reshape(Nb, H, WC).astype(o_ref.dtype)


def _fused_banded_weights(w, bn_scale, W, compute_dtype):
    """w: [3, 3, Cin, Cout] HWIO conv weight.

    Returns a [3*W*Cin, W*Cout] block-banded matrix: the 3 horizontal taps and the horizontal
    zero padding are folded into each band, the 3 vertical-tap bands are stacked along K, and
    the (inference-mode) BatchNorm scale is folded per output channel.  Fold in f32, cast last.
    """
    w = w.astype(jnp.float32) * bn_scale.astype(jnp.float32)
    bands = []
    for dy in range(3):
        band = sum(jnp.kron(jnp.eye(W, k=1 - dx, dtype=jnp.float32), w[dy, dx])
                   for dx in range(3))
        bands.append(band)
    return jnp.concatenate(bands, axis=0).astype(compute_dtype)


def _pick_batch_block(N, H, max_m=256):
    """Largest divisor Nb of N with Nb*H <= max_m; prefer >= 2 grid steps for megacore."""
    divisors = [d for d in range(1, N + 1) if N % d == 0]
    candidates = [d for d in divisors if d * H <= max_m] or [1]
    nb = max(candidates)
    if nb == N and N > 1:
        smaller = [d for d in candidates if d < N]
        if smaller and max(smaller) * H >= 64:
            nb = max(smaller)
    return nb


def basic_block_res(x, w1, gamma1, beta1, mean1, var1,
                    w2, gamma2, beta2, mean2, var2,
                    eps=1e-5, compute_dtype=jnp.bfloat16, batch_block=None):
    """x: [N, H, W, Cin] NHWC (PyTorch's NCHW input permuted).
    w1: [3, 3, Cin, C] HWIO, w2: [3, 3, C, C] HWIO.
    compute_dtype=bfloat16 (MXU operands); accumulation / bias / residual / ReLU stay f32."""
    N, H, W, Cin = x.shape
    C = w1.shape[-1]
    assert Cin == C, "identity shortcut requires inplanes == planes (stride=1, no downsample)"

    Nb = _pick_batch_block(N, H) if batch_block is None else batch_block
    assert N % Nb == 0, "batch_block must divide N"

    # Fold inference-mode BatchNorm into per-channel scale + bias.
    s1 = gamma1 / jnp.sqrt(var1 + eps)
    b1 = beta1 - mean1 * s1
    s2 = gamma2 / jnp.sqrt(var2 + eps)
    b2 = beta2 - mean2 * s2

    WCin = W * Cin
    WC = W * C
    w1b = _fused_banded_weights(w1, s1, W, compute_dtype)   # [3*W*Cin, W*C], BN1 scale folded
    w2b = _fused_banded_weights(w2, s2, W, compute_dtype)   # [3*W*C,   W*C], BN2 scale folded
    b1t = jnp.tile(b1.astype(jnp.float32), W).reshape(1, WC)
    b2t = jnp.tile(b2.astype(jnp.float32), W).reshape(1, WC)

    x_flat = x.reshape(N, H, WCin)                          # lane-dense activation layout

    kernel = functools.partial(basic_block_kernel, Nb=Nb, H=H, compute_dtype=compute_dtype)

    out_flat = pl.pallas_call(
        kernel,
        out_shape=jax.ShapeDtypeStruct((N, H, WC), x.dtype),
        grid_spec=pltpu.PrefetchScalarGridSpec(
            num_scalar_prefetch=0,
            grid=(N // Nb,),
            in_specs=[
                # activations: Nb images per step -> M = Nb*H matmul rows
                pl.BlockSpec((Nb, H, WCin), lambda b: (b, 0, 0)),
                # constants (grid-invariant index_map) -> single-buffered
                pl.BlockSpec((3 * WCin, WC), lambda b: (0, 0),
                             pipeline_mode=pl.Buffered(1)),
                pl.BlockSpec((1, WC), lambda b: (0, 0),
                             pipeline_mode=pl.Buffered(1)),
                pl.BlockSpec((3 * WC, WC), lambda b: (0, 0),
                             pipeline_mode=pl.Buffered(1)),
                pl.BlockSpec((1, WC), lambda b: (0, 0),
                             pipeline_mode=pl.Buffered(1)),
            ],
            out_specs=pl.BlockSpec((Nb, H, WC), lambda b: (b, 0, 0)),
            scratch_shapes=[
                pltpu.VMEM((Nb, H + 2, WCin), compute_dtype),   # row-padded input (per-image halo)
                pltpu.VMEM((Nb, H + 2, WC), compute_dtype),     # row-padded hidden (per-image halo)
            ],
        ),
        compiler_params=pltpu.CompilerParams(dimension_semantics=("parallel",)),
    )(x_flat, w1b, b1t, w2b, b2t)

    return out_flat.reshape(N, H, W, C)


def basic_block_ref(x, w1, gamma1, beta1, mean1, var1,
                    w2, gamma2, beta2, mean2, var2, eps=1e-5):
    """Pure-JAX reference (inference-mode BN), NHWC / HWIO."""
    def conv(a, w):
        return jax.lax.conv_general_dilated(
            a, w, window_strides=(1, 1), padding="SAME",
            dimension_numbers=("NHWC", "HWIO", "NHWC"))

    def bn(a, g, b, m, v):
        return (a - m) / jnp.sqrt(v + eps) * g + b

    out = jax.nn.relu(bn(conv(x, w1), gamma1, beta1, mean1, var1))
    out = bn(conv(out, w2), gamma2, beta2, mean2, var2)
    return jax.nn.relu(out + x)


if __name__ == "__main__":
    key = jax.random.PRNGKey(0)
    # inplanes = planes = 8, stride = 1, no downsample; W*C = 128 (lane-dense),
    # batching picks Nb = 8 -> M = Nb*H = 128 matmul rows per step, grid = (2,).
    N, H, W, C = 16, 16, 16, 8

    ks = jax.random.split(key, 11)
    x = jax.random.normal(ks[0], (N, H, W, C), jnp.float32)

    w1 = jax.random.normal(ks[1], (3, 3, C, C), jnp.float32) * 0.1
    w2 = jax.random.normal(ks[2], (3, 3, C, C), jnp.float32) * 0.1

    gamma1 = jax.random.uniform(ks[3], (C,), jnp.float32, 0.5, 1.5)
    beta1 = jax.random.normal(ks[4], (C,), jnp.float32) * 0.1
    mean1 = jax.random.normal(ks[5], (C,), jnp.float32) * 0.1
    var1 = jax.random.uniform(ks[6], (C,), jnp.float32, 0.5, 1.5)

    gamma2 = jax.random.uniform(ks[7], (C,), jnp.float32, 0.5, 1.5)
    beta2 = jax.random.normal(ks[8], (C,), jnp.float32) * 0.1
    mean2 = jax.random.normal(ks[9], (C,), jnp.float32) * 0.1
    var2 = jax.random.uniform(ks[10], (C,), jnp.float32, 0.5, 1.5)

    ref = basic_block_ref(x, w1, gamma1, beta1, mean1, var1,
                          w2, gamma2, beta2, mean2, var2)

    # Exact-mode check (f32 operands).
    out_f32 = basic_block_res(x, w1, gamma1, beta1, mean1, var1,
                              w2, gamma2, beta2, mean2, var2,
                              compute_dtype=jnp.float32)
    out_f32 = jax.block_until_ready(out_f32)
    np.testing.assert_allclose(np.asarray(out_f32), np.asarray(ref), rtol=1e-4, atol=1e-4)

    # Default path: bf16 MXU operands, f32 accumulation (recommended on v5e/v6e/v7x).
    out_bf16 = basic_block_res(x, w1, gamma1, beta1, mean1, var1,
                               w2, gamma2, beta2, mean2, var2)
    out_bf16 = jax.block_until_ready(out_bf16)
    np.testing.assert_allclose(np.asarray(out_bf16), np.asarray(ref), rtol=5e-2, atol=5e-2)

    print("KERNEL_OK")
</pallas_src>

<mosaic_0001>
module attributes {stable_mosaic.version = 11 : i64} {
  func.func @basic_block_kernel(%arg0: i32, %arg1: memref<8x16x128xf32, #tpu.memory_space<vmem>>, %arg2: memref<384x128xf32, #tpu.memory_space<vmem>>, %arg3: memref<1x128xf32, #tpu.memory_space<vmem>>, %arg4: memref<384x128xf32, #tpu.memory_space<vmem>>, %arg5: memref<1x128xf32, #tpu.memory_space<vmem>>, %arg6: memref<8x16x128xf32, #tpu.memory_space<vmem>>, %arg7: memref<8x18x128xf32, #tpu.memory_space<vmem>>, %arg8: memref<8x18x128xf32, #tpu.memory_space<vmem>>) attributes {dimension_semantics = [#tpu.dimension_semantics<parallel>], iteration_bounds = array<i64: 2>, scalar_prefetch = 0 : i64, scratch_operands = 2 : i64, tpu.core_type = #tpu.core_type<tc>, window_params = [{transform_indices = @transform_0, window_bounds = array<i64: 8, 16, 128>}, {pipeline_mode = #tpu.pipeline_mode<synchronous>, transform_indices = @transform_1, window_bounds = array<i64: 384, 128>}, {pipeline_mode = #tpu.pipeline_mode<synchronous>, transform_indices = @transform_2, window_bounds = array<i64: 1, 128>}, {pipeline_mode = #tpu.pipeline_mode<synchronous>, transform_indices = @transform_3, window_bounds = array<i64: 384, 128>}, {pipeline_mode = #tpu.pipeline_mode<synchronous>, transform_indices = @transform_4, window_bounds = array<i64: 1, 128>}, {transform_indices = @transform_5, window_bounds = array<i64: 8, 16, 128>}]} {
    %cst = arith.constant 0.000000e+00 : f32
    %0 = vector.broadcast %cst : f32 to vector<8x1x128xf32>
    %c0 = arith.constant 0 : index
    %c0_0 = arith.constant 0 : index
    %c0_1 = arith.constant 0 : index
    %1 = vector.load %arg7[%c0, %c0_0, %c0_1] : memref<8x18x128xf32, #tpu.memory_space<vmem>>, vector<8x1x128xf32>
    tpu.vector_store %arg7[%c0, %c0_0, %c0_1], %0 {strides = array<i32>} : memref<8x18x128xf32, #tpu.memory_space<vmem>>, vector<8x1x128xf32>,
    %cst_2 = arith.constant 0.000000e+00 : f32
    %2 = vector.broadcast %cst_2 : f32 to vector<8x1x128xf32>
    %c0_3 = arith.constant 0 : index
    %c17 = arith.constant 17 : index
    %c0_4 = arith.constant 0 : index
    %3 = vector.load %arg7[%c0_3, %c17, %c0_4] : memref<8x18x128xf32, #tpu.memory_space<vmem>>, vector<8x1x128xf32>
    tpu.vector_store %arg7[%c0_3, %c17, %c0_4], %2 {strides = array<i32>} : memref<8x18x128xf32, #tpu.memory_space<vmem>>, vector<8x1x128xf32>,
    %cst_5 = arith.constant 0.000000e+00 : f32
    %4 = vector.broadcast %cst_5 : f32 to vector<8x1x128xf32>
    %c0_6 = arith.constant 0 : index
    %c0_7 = arith.constant 0 : index
    %c0_8 = arith.constant 0 : index
    %5 = vector.load %arg8[%c0_6, %c0_7, %c0_8] : memref<8x18x128xf32, #tpu.memory_space<vmem>>, vector<8x1x128xf32>
    tpu.vector_store %arg8[%c0_6, %c0_7, %c0_8], %4 {strides = array<i32>} : memref<8x18x128xf32, #tpu.memory_space<vmem>>, vector<8x1x128xf32>,
    %cst_9 = arith.constant 0.000000e+00 : f32
    %6 = vector.broadcast %cst_9 : f32 to vector<8x1x128xf32>
    %c0_10 = arith.constant 0 : index
    %c17_11 = arith.constant 17 : index
    %c0_12 = arith.constant 0 : index
    %7 = vector.load %arg8[%c0_10, %c17_11, %c0_12] : memref<8x18x128xf32, #tpu.memory_space<vmem>>, vector<8x1x128xf32>
    tpu.vector_store %arg8[%c0_10, %c17_11, %c0_12], %6 {strides = array<i32>} : memref<8x18x128xf32, #tpu.memory_space<vmem>>, vector<8x1x128xf32>,
    %c0_13 = arith.constant 0 : index
    %c0_14 = arith.constant 0 : index
    %c0_15 = arith.constant 0 : index
    %8 = vector.load %arg1[%c0_13, %c0_14, %c0_15] : memref<8x16x128xf32, #tpu.memory_space<vmem>>, vector<8x16x128xf32>
    %c0_16 = arith.constant 0 : index
    %c1 = arith.constant 1 : index
    %c0_17 = arith.constant 0 : index
    %9 = vector.load %arg7[%c0_16, %c1, %c0_17] : memref<8x18x128xf32, #tpu.memory_space<vmem>>, vector<8x16x128xf32>
    tpu.vector_store %arg7[%c0_16, %c1, %c0_17], %8 {strides = array<i32>} : memref<8x18x128xf32, #tpu.memory_space<vmem>>, vector<8x16x128xf32>,
    %c0_18 = arith.constant 0 : index
    %c0_19 = arith.constant 0 : index
    %c0_20 = arith.constant 0 : index
    %10 = vector.load %arg7[%c0_18, %c0_19, %c0_20] : memref<8x18x128xf32, #tpu.memory_space<vmem>>, vector<8x16x128xf32>
    %c0_21 = arith.constant 0 : index
    %c1_22 = arith.constant 1 : index
    %c0_23 = arith.constant 0 : index
    %11 = vector.load %arg7[%c0_21, %c1_22, %c0_23] : memref<8x18x128xf32, #tpu.memory_space<vmem>>, vector<8x16x128xf32>
    %c0_24 = arith.constant 0 : index
    %c2 = arith.constant 2 : index
    %c0_25 = arith.constant 0 : index
    %12 = vector.load %arg7[%c0_24, %c2, %c0_25] : memref<8x18x128xf32, #tpu.memory_space<vmem>>, vector<8x16x128xf32>
    %13 = tpu.concatenate %10, %11, %12 in 2 : vector<8x16x128xf32>, vector<8x16x128xf32>, vector<8x16x128xf32> -> vector<8x16x384xf32>
    %14 = vector.shape_cast %13 : vector<8x16x384xf32> to vector<128x384xf32>
    %c0_26 = arith.constant 0 : index
    %c0_27 = arith.constant 0 : index
    %15 = vector.load %arg2[%c0_26, %c0_27] : memref<384x128xf32, #tpu.memory_space<vmem>>, vector<384x128xf32>
    %cst_28 = arith.constant dense<0.000000e+00> : vector<128x128xf32>
    %16 = tpu.matmul %14, %15, %cst_28 {dimension_numbers = #tpu.dot_dimension_numbers<[1], [0], [0], [1], [0, 0, 1, 1], [], []>} : vector<128x384xf32>, vector<384x128xf32>, vector<128x128xf32> -> vector<128x128xf32>
    %c0_29 = arith.constant 0 : index
    %c0_30 = arith.constant 0 : index
    %17 = vector.load %arg3[%c0_29, %c0_30] : memref<1x128xf32, #tpu.memory_space<vmem>>, vector<1x128xf32>
    %18 = vector.broadcast %17 : vector<1x128xf32> to vector<128x128xf32>
    %19 = arith.addf %16, %18 : vector<128x128xf32>
    %cst_31 = arith.constant 0.000000e+00 : f32
    %20 = vector.broadcast %cst_31 : f32 to vector<128x128xf32>
    %21 = arith.maximumf %19, %20 : vector<128x128xf32>
    %22 = vector.shape_cast %21 : vector<128x128xf32> to vector<8x16x128xf32>
    %c0_32 = arith.constant 0 : index
    %c1_33 = arith.constant 1 : index
    %c0_34 = arith.constant 0 : index
    %23 = vector.load %arg8[%c0_32, %c1_33, %c0_34] : memref<8x18x128xf32, #tpu.memory_space<vmem>>, vector<8x16x128xf32>
    tpu.vector_store %arg8[%c0_32, %c1_33, %c0_34], %22 {strides = array<i32>} : memref<8x18x128xf32, #tpu.memory_space<vmem>>, vector<8x16x128xf32>,
    %c0_35 = arith.constant 0 : index
    %c0_36 = arith.constant 0 : index
    %c0_37 = arith.constant 0 : index
    %24 = vector.load %arg8[%c0_35, %c0_36, %c0_37] : memref<8x18x128xf32, #tpu.memory_space<vmem>>, vector<8x16x128xf32>
    %c0_38 = arith.constant 0 : index
    %c1_39 = arith.constant 1 : index
    %c0_40 = arith.constant 0 : index
    %25 = vector.load %arg8[%c0_38, %c1_39, %c0_40] : memref<8x18x128xf32, #tpu.memory_space<vmem>>, vector<8x16x128xf32>
    %c0_41 = arith.constant 0 : index
    %c2_42 = arith.constant 2 : index
    %c0_43 = arith.constant 0 : index
    %26 = vector.load %arg8[%c0_41, %c2_42, %c0_43] : memref<8x18x128xf32, #tpu.memory_space<vmem>>, vector<8x16x128xf32>
    %27 = tpu.concatenate %24, %25, %26 in 2 : vector<8x16x128xf32>, vector<8x16x128xf32>, vector<8x16x128xf32> -> vector<8x16x384xf32>
    %28 = vector.shape_cast %27 : vector<8x16x384xf32> to vector<128x384xf32>
    %c0_44 = arith.constant 0 : index
    %c0_45 = arith.constant 0 : index
    %29 = vector.load %arg4[%c0_44, %c0_45] : memref<384x128xf32, #tpu.memory_space<vmem>>, vector<384x128xf32>
    %cst_46 = arith.constant dense<0.000000e+00> : vector<128x128xf32>
    %30 = tpu.matmul %28, %29, %cst_46 {dimension_numbers = #tpu.dot_dimension_numbers<[1], [0], [0], [1], [0, 0, 1, 1], [], []>} : vector<128x384xf32>, vector<384x128xf32>, vector<128x128xf32> -> vector<128x128xf32>
    %c0_47 = arith.constant 0 : index
    %c0_48 = arith.constant 0 : index
    %31 = vector.load %arg5[%c0_47, %c0_48] : memref<1x128xf32, #tpu.memory_space<vmem>>, vector<1x128xf32>
    %32 = vector.broadcast %31 : vector<1x128xf32> to vector<128x128xf32>
    %33 = arith.addf %30, %32 : vector<128x128xf32>
    %c0_49 = arith.constant 0 : index
    %c0_50 = arith.constant 0 : index
    %c0_51 = arith.constant 0 : index
    %34 = vector.load %arg1[%c0_49, %c0_50, %c0_51] : memref<8x16x128xf32, #tpu.memory_space<vmem>>, vector<8x16x128xf32>
    %35 = vector.shape_cast %34 : vector<8x16x128xf32> to vector<128x128xf32>
    %36 = arith.addf %33, %35 : vector<128x128xf32>
    %cst_52 = arith.constant 0.000000e+00 : f32
    %37 = vector.broadcast %cst_52 : f32 to vector<128x128xf32>
    %38 = arith.maximumf %36, %37 : vector<128x128xf32>
    %39 = vector.shape_cast %38 : vector<128x128xf32> to vector<8x16x128xf32>
    %c0_53 = arith.constant 0 : index
    %c0_54 = arith.constant 0 : index
    %c0_55 = arith.constant 0 : index
    %40 = vector.load %arg6[%c0_53, %c0_54, %c0_55] : memref<8x16x128xf32, #tpu.memory_space<vmem>>, vector<8x16x128xf32>
    tpu.vector_store %arg6[%c0_53, %c0_54, %c0_55], %39 {strides = array<i32>} : memref<8x16x128xf32, #tpu.memory_space<vmem>>, vector<8x16x128xf32>,
    return
  }
  func.func @transform_0(%arg0: i32) -> (i32, i32, i32) {
    %c0_i32 = arith.constant 0 : i32
    %c0_i32_0 = arith.constant 0 : i32
    %c0_i32_1 = arith.constant 0 : i32
    return %arg0, %c0_i32, %c0_i32_0 : i32, i32, i32
  }
  func.func @transform_1(%arg0: i32) -> (i32, i32) {
    %c0_i32 = arith.constant 0 : i32
    %c0_i32_0 = arith.constant 0 : i32
    %c0_i32_1 = arith.constant 0 : i32
    return %c0_i32, %c0_i32_0 : i32, i32
  }
  func.func @transform_2(%arg0: i32) -> (i32, i32) {
    %c0_i32 = arith.constant 0 : i32
    %c0_i32_0 = arith.constant 0 : i32
    %c0_i32_1 = arith.constant 0 : i32
    return %c0_i32, %c0_i32_0 : i32, i32
  }
  func.func @transform_3(%arg0: i32) -> (i32, i32) {
    %c0_i32 = arith.constant 0 : i32
    %c0_i32_0 = arith.constant 0 : i32
    %c0_i32_1 = arith.constant 0 : i32
    return %c0_i32, %c0_i32_0 : i32, i32
  }
  func.func @transform_4(%arg0: i32) -> (i32, i32) {
    %c0_i32 = arith.constant 0 : i32
    %c0_i32_0 = arith.constant 0 : i32
    %c0_i32_1 = arith.constant 0 : i32
    return %c0_i32, %c0_i32_0 : i32, i32
  }
  func.func @transform_5(%arg0: i32) -> (i32, i32, i32) {
    %c0_i32 = arith.constant 0 : i32
    %c0_i32_0 = arith.constant 0 : i32
    %c0_i32_1 = arith.constant 0 : i32
    return %arg0, %c0_i32, %c0_i32_0 : i32, i32, i32
  }
}

</mosaic_0001>

<llo_original>
// kernel: tpu_custom_call.1
$region0: #{tpu_custom_call.1}
  #allocation0 [shape = 'u32[]', space=smem, size = 0x4, offset = 0x4, fixed_abs, tag = 'smem constant byte address 0x4 - core index']
  #allocation1 [shape = 'u32[72,128]{1,0:T(1,128)}', space=vmem, size = 0x9000, scoped, tag = 'internal scratch']
  #allocation2 [shape = 'f32[8,18,128]{2,1,0:T(8,128)}', space=vmem, size = 0x18000, scoped, tag = 'scratch operand']
  #allocation3 [shape = 'f32[8,18,128]{2,1,0:T(8,128)}', space=vmem, size = 0x18000, scoped, tag = 'scratch operand']
  %s0 = inlined_call_operand.hbm [shape: f32[16,16,128], index: 0, kind: input, shape index: {}]
  %s1 = inlined_call_operand.hbm [shape: f32[384,128], index: 1, kind: input, shape index: {}]
  %s2 = inlined_call_operand.vmem [shape: f32[1,128], index: 2, kind: input, shape index: {}]
  %s3 = inlined_call_operand.hbm [shape: f32[384,128], index: 3, kind: input, shape index: {}]
  %s4 = inlined_call_operand.vmem [shape: f32[1,128], index: 4, kind: input, shape index: {}]
  %s5 = inlined_call_operand.hbm [shape: f32[16,16,128], index: 5, kind: output, shape index: {}]
  %s6 = sld [smem:[#allocation0]]
  $region65: #{tpu_custom_call.1} parent=0
    _
  %s8 = ssub.s32 1, %s6
  %s9 = scalar_select 0, %s8, %s6
  $region1: #{tpu_custom_call.1} parent=0
    #allocation4 [shape = 'u8[131072]{0}', space=vmem, size = 0x20000, scoped, tag = 'input window, operand 0']
    #allocation5 [shape = 's32[2]{0}', space=sflag, size = 0x8, scoped, tag = 'scoped memory for tpu_custom_call.1']
    #allocation6 [shape = 's32[2]{0}', space=sflag, size = 0x8, scoped, tag = 'scoped memory for tpu_custom_call.1']
    #allocation7 [shape = 'u8[196608]{0}', space=vmem, size = 0x30000, scoped, tag = 'input window, operand 1, single buffered']
    #allocation8 [shape = 's32[1]{0}', space=sflag, size = 0x4, scoped, tag = 'scoped memory for tpu_custom_call.1']
    #allocation9 [shape = 'u8[196608]{0}', space=vmem, size = 0x30000, scoped, tag = 'input window, operand 3, single buffered']
    #allocation10 [shape = 'u8[131072]{0}', space=vmem, size = 0x20000, scoped, tag = 'output window, operand 0']
    %10 = vsyncpa [#allocation5], 0
    %s11 = scalar_lea.sflag [#allocation5], 1
    %12 = vsyncpa %s11, 0
    %13 = vsyncpa [#allocation8], 0
    %14 = vsyncpa [#allocation6], 0
    %s15 = scalar_lea.sflag [#allocation6], 1
    %16 = vsyncpa %s15, 0
    loop: start=0, step=1, limit=4
    $region2: #{tpu_custom_call.1} parent=1 // loop_pre_header
      _
    $region3: #{tpu_custom_call.1} parent=1 // loop_header
      %s18 = sphi 0, %s22
      %p19 = scmp.ge.s32.totalorder %s18, 4
      %s28 = sphi 0, %s30
      %s31 = sphi 0, %s28
      %s32 = sphi 0, %s31
      %s48 = sphi 0, %s32
      %s52 = sphi 0, %s52
      %s54 = sphi 0, %s52
      %s55 = sphi 0, %s54
      %s69 = sphi 0, %s55
      %s73 = sphi 0, %s73
      %s75 = sphi 0, %s73
      %s76 = sphi 0, %s75
      %s90 = sphi 0, %s76
      %s94 = sphi 0, %s94
      %s96 = sphi 0, %s94
      %s97 = sphi 0, %s96
      %s111 = sphi 0, %s97
      %s115 = sphi 0, %s115
      %s117 = sphi 0, %s115
      %s118 = sphi 0, %s117
      %s132 = sphi 0, %s118
      %s138 = sphi 0, %s140
      %s141 = sphi 0, %s138
      %s142 = sphi 0, %s141
      %s158 = sphi 0, %s142
    $region4: #{tpu_custom_call.1} parent=1 // loop_header_branch
      %21 = sbr.rel (%p19) target = $region8
    $region5: #{tpu_custom_call.1} parent=1 // loop_body
      %s23 = ssub.s32 %s18, 1
      %s24 = ssub.s32 %s18, 2
      %s25 = sadd.s32 %s18, 1
      %s26 = ssub.s32 %s18, %s25
      %p27 = scmp.eq.s32.totalorder %s26, 0
      %s29 = sadd.s32 %s28, 1
      %s30 = scalar_select %p27, %s28, %s29
      %p33 = pneg %p27
      %p34 = scmp.eq.s32.totalorder %s18, 1
      %p35 = por %p33, %p34
      %p36 = scmp.ne.s32.totalorder %s28, %s31
      %p37 = scmp.eq.s32.totalorder %s18, 0
      %p38 = por %p36, %p37
      %p39 = scmp.ne.s32.totalorder %s28, %s31
      %p40 = scmp.eq.s32.totalorder %s23, 1
      %p41 = por %p39, %p40
      %p42 = scmp.ne.s32.totalorder %s31, %s32
      %p43 = scmp.eq.s32.totalorder %s23, 0
      %p44 = por %p42, %p43
      %p45 = scmp.ne.s32.totalorder %s31, %s32
      %p46 = scmp.eq.s32.totalorder %s24, 1
      %p47 = por %p45, %p46
      %p49 = scmp.ne.s32.totalorder %s32, %s48
      %p50 = scmp.eq.s32.totalorder %s24, 0
      %p51 = por %p49, %p50
      %s53 = sadd.s32 %s52, 1
      %p56 = scmp.eq.s32.totalorder %s18, 1
      %p57 = scmp.ne.s32.totalorder %s52, %s54
      %p58 = scmp.eq.s32.totalorder %s18, 0
      %p59 = por %p57, %p58
      %p60 = scmp.ne.s32.totalorder %s52, %s54
      %p61 = scmp.eq.s32.totalorder %s23, 1
      %p62 = por %p60, %p61
      %p63 = scmp.ne.s32.totalorder %s54, %s55
      %p64 = scmp.eq.s32.totalorder %s23, 0
      %p65 = por %p63, %p64
      %p66 = scmp.ne.s32.totalorder %s54, %s55
      %p67 = scmp.eq.s32.totalorder %s24, 1
      %p68 = por %p66, %p67
      %p70 = scmp.ne.s32.totalorder %s55, %s69
      %p71 = scmp.eq.s32.totalorder %s24, 0
      %p72 = por %p70, %p71
      %s74 = sadd.s32 %s73, 1
      %p77 = scmp.eq.s32.totalorder %s18, 1
      %p78 = scmp.ne.s32.totalorder %s73, %s75
      %p79 = scmp.eq.s32.totalorder %s18, 0
      %p80 = por %p78, %p79
      %p81 = scmp.ne.s32.totalorder %s73, %s75
      %p82 = scmp.eq.s32.totalorder %s23, 1
      %p83 = por %p81, %p82
      %p84 = scmp.ne.s32.totalorder %s75, %s76
      %p85 = scmp.eq.s32.totalorder %s23, 0
      %p86 = por %p84, %p85
      %p87 = scmp.ne.s32.totalorder %s75, %s76
      %p88 = scmp.eq.s32.totalorder %s24, 1
      %p89 = por %p87, %p88
      %p91 = scmp.ne.s32.totalorder %s76, %s90
      %p92 = scmp.eq.s32.totalorder %s24, 0
      %p93 = por %p91, %p92
      %s95 = sadd.s32 %s94, 1
      %p98 = scmp.eq.s32.totalorder %s18, 1
      %p99 = scmp.ne.s32.totalorder %s94, %s96
      %p100 = scmp.eq.s32.totalorder %s18, 0
      %p101 = por %p99, %p100
      %p102 = scmp.ne.s32.totalorder %s94, %s96
      %p103 = scmp.eq.s32.totalorder %s23, 1
      %p104 = por %p102, %p103
      %p105 = scmp.ne.s32.totalorder %s96, %s97
      %p106 = scmp.eq.s32.totalorder %s23, 0
      %p107 = por %p105, %p106
      %p108 = scmp.ne.s32.totalorder %s96, %s97
      %p109 = scmp.eq.s32.totalorder %s24, 1
      %p110 = por %p108, %p109
      %p112 = scmp.ne.s32.totalorder %s97, %s111
      %p113 = scmp.eq.s32.totalorder %s24, 0
      %p114 = por %p112, %p113
      %s116 = sadd.s32 %s115, 1
      %p119 = scmp.eq.s32.totalorder %s18, 1
      %p120 = scmp.ne.s32.totalorder %s115, %s117
      %p121 = scmp.eq.s32.totalorder %s18, 0
      %p122 = por %p120, %p121
      %p123 = scmp.ne.s32.totalorder %s115, %s117
      %p124 = scmp.eq.s32.totalorder %s23, 1
      %p125 = por %p123, %p124
      %p126 = scmp.ne.s32.totalorder %s117, %s118
      %p127 = scmp.eq.s32.totalorder %s23, 0
      %p128 = por %p126, %p127
      %p129 = scmp.ne.s32.totalorder %s117, %s118
      %p130 = scmp.eq.s32.totalorder %s24, 1
      %p131 = por %p129, %p130
      %p133 = scmp.ne.s32.totalorder %s118, %s132
      %p134 = scmp.eq.s32.totalorder %s24, 0
      %p135 = por %p133, %p134
      %s136 = ssub.s32 %s18, %s25
      %p137 = scmp.eq.s32.totalorder %s136, 0
      %s139 = sadd.s32 %s138, 1
      %s140 = scalar_select %p137, %s138, %s139
      %p143 = pneg %p137
      %p144 = scmp.eq.s32.totalorder %s18, 1
      %p145 = por %p143, %p144
      %p146 = scmp.ne.s32.totalorder %s138, %s141
      %p147 = scmp.eq.s32.totalorder %s18, 0
      %p148 = por %p146, %p147
      %p149 = scmp.ne.s32.totalorder %s138, %s141
      %p150 = scmp.eq.s32.totalorder %s23, 1
      %p151 = por %p149, %p150
      %p152 = scmp.ne.s32.totalorder %s141, %s142
      %p153 = scmp.eq.s32.totalorder %s23, 0
      %p154 = por %p152, %p153
      %p155 = scmp.ne.s32.totalorder %s141, %s142
      %p156 = scmp.eq.s32.totalorder %s24, 1
      %p157 = por %p155, %p156
      %p159 = scmp.ne.s32.totalorder %s142, %s158
      %p160 = scmp.eq.s32.totalorder %s24, 0
      %p161 = por %p159, %p160
      %p162 = scmp.le.s32.totalorder 1, %s18
      %p163 = scmp.lt.s32.totalorder %s18, 3
      %p164 = pnand %p162, %p163
      %p165 = pneg %p164
      // Predicated region
      $region9: #{tpu_custom_call.1} parent=5 // pred_check
        _
      $region10: #{tpu_custom_call.1} parent=5 // pred_check_branch
        %167 = sbr.rel (%p164) target = $region12
      $region11: #{tpu_custom_call.1} parent=5 // pred_region
        %s168 = ssub.s32 %s18, 1
        // Predicated region
        $region13: #{tpu_custom_call.1} parent=11 // pred_check
          %p169 = pneg %p65
        $region14: #{tpu_custom_call.1} parent=11 // pred_check_branch
          %171 = sbr.rel (%p169) target = $region16
        $region15: #{tpu_custom_call.1} parent=11 // pred_region
          %173 = vsyncadd [#allocation8], 0
          %s174 = sshll.u32 %s1, 4
          %s175 = int_to_ptr.hbm [resolvable:$true] %s174
          %s176 = sshll.u32 [#allocation7], 4
          %s177 = int_to_ptr.vmem [resolvable:$true] %s176
          %182 = dma.hbm_to_vmem [thread:$0]  %s175, 6144, %s177, [#allocation8], 128, 128, 8
        $region16: #{tpu_custom_call.1} parent=11 // pred_fallthru
          _
        // Predicated region
        $region17: #{tpu_custom_call.1} parent=11 // pred_check
          %p183 = pneg %p86
        $region18: #{tpu_custom_call.1} parent=11 // pred_check_branch
          %185 = sbr.rel (%p183) target = $region20
        $region19: #{tpu_custom_call.1} parent=11 // pred_region
          _
        $region20: #{tpu_custom_call.1} parent=11 // pred_fallthru
          _
        // Predicated region
        $region21: #{tpu_custom_call.1} parent=11 // pred_check
          %p186 = pneg %p107
        $region22: #{tpu_custom_call.1} parent=11 // pred_check_branch
          %188 = sbr.rel (%p186) target = $region24
        $region23: #{tpu_custom_call.1} parent=11 // pred_region
          %190 = vsyncadd [#allocation8], 0
          %s191 = sshll.u32 %s3, 4
          %s192 = int_to_ptr.hbm [resolvable:$true] %s191
          %s193 = sshll.u32 [#allocation9], 4
          %s194 = int_to_ptr.vmem [resolvable:$true] %s193
          %199 = dma.hbm_to_vmem [thread:$0]  %s192, 6144, %s194, [#allocation8], 128, 128, 8
        $region24: #{tpu_custom_call.1} parent=11 // pred_fallthru
          _
        // Predicated region
        $region25: #{tpu_custom_call.1} parent=11 // pred_check
          %p200 = pneg %p128
        $region26: #{tpu_custom_call.1} parent=11 // pred_check_branch
          %202 = sbr.rel (%p200) target = $region28
        $region27: #{tpu_custom_call.1} parent=11 // pred_region
          _
        $region28: #{tpu_custom_call.1} parent=11 // pred_fallthru
          _
      $region12: #{tpu_custom_call.1} parent=5 // pred_fallthru
        _
      %p203 = scmp.lt.s32.totalorder %s18, 2
      // Predicated region
      $region29: #{tpu_custom_call.1} parent=5 // pred_check
        %p204 = pneg %p203
      $region30: #{tpu_custom_call.1} parent=5 // pred_check_branch
        %206 = sbr.rel (%p204) target = $region32
      $region31: #{tpu_custom_call.1} parent=5 // pred_region
        // Predicated region
        $region33: #{tpu_custom_call.1} parent=31 // pred_check
          %p207 = pneg %p38
        $region34: #{tpu_custom_call.1} parent=31 // pred_check_branch
          %209 = sbr.rel (%p207) target = $region36
        $region35: #{tpu_custom_call.1} parent=31 // pred_region
          %s210 = sand.u32 %s28, 1
          %s211 = scalar_lea.sflag [#allocation5], %s210
          %s212 = sand.u32 %s28, 1
          %s213 = smul.addr %s212, 128
          %s214 = scalar_lea.vmem [#allocation4], %s213
          %s215 = smul.u32 8, %s18
          %217 = vsyncadd %s211, 0
          %s218 = smul.addr %s215, 2
          %s219 = smul.addr %s218, 8
          %s220 = scalar_lea.hbm %s0, %s219
          %s221 = sshll.u32 %s220, 4
          %s222 = int_to_ptr.hbm [resolvable:$true] %s221
          %s223 = sshll.u32 %s214, 4
          %s224 = int_to_ptr.vmem [resolvable:$true] %s223
          %229 = dma.hbm_to_vmem [thread:$0]  %s222, 2048, %s224, %s211, 128, 128, 8
        $region36: #{tpu_custom_call.1} parent=31 // pred_fallthru
          _
      $region32: #{tpu_custom_call.1} parent=5 // pred_fallthru
        _
      %p230 = scmp.le.s32.totalorder 1, %s18
      %p231 = scmp.lt.s32.totalorder %s18, 3
      %p232 = pnand %p230, %p231
      %p233 = pneg %p232
      // Predicated region
      $region37: #{tpu_custom_call.1} parent=5 // pred_check
        _
      $region38: #{tpu_custom_call.1} parent=5 // pred_check_branch
        %235 = sbr.rel (%p232) target = $region40
      $region39: #{tpu_custom_call.1} parent=5 // pred_region
        %s236 = ssub.s32 %s18, 1
        %s237 = sand.u32 %s31, 1
        %s238 = scalar_lea.sflag [#allocation5], %s237
        %s239 = sand.u32 %s31, 1
        %s240 = smul.addr %s239, 128
        %s241 = scalar_lea.vmem [#allocation4], %s240
        // Predicated region
        $region41: #{tpu_custom_call.1} parent=39 // pred_check
          %p242 = pneg %p44
        $region42: #{tpu_custom_call.1} parent=39 // pred_check_branch
          %244 = sbr.rel (%p242) target = $region44
        $region43: #{tpu_custom_call.1} parent=39 // pred_region
          %246 = dma.done %s238, 2048
        $region44: #{tpu_custom_call.1} parent=39 // pred_fallthru
          _
        // Predicated region
        $region45: #{tpu_custom_call.1} parent=39 // pred_check
          %p247 = pneg %p65
        $region46: #{tpu_custom_call.1} parent=39 // pred_check_branch
          %249 = sbr.rel (%p247) target = $region48
        $region47: #{tpu_custom_call.1} parent=39 // pred_region
          %251 = dma.done [#allocation8], 6144
        $region48: #{tpu_custom_call.1} parent=39 // pred_fallthru
          _
        // Predicated region
        $region49: #{tpu_custom_call.1} parent=39 // pred_check
          %p252 = pneg %p107
        $region50: #{tpu_custom_call.1} parent=39 // pred_check_branch
          %254 = sbr.rel (%p252) target = $region52
        $region51: #{tpu_custom_call.1} parent=39 // pred_region
          %256 = dma.done [#allocation8], 6144
        $region52: #{tpu_custom_call.1} parent=39 // pred_fallthru
          _
        %s257 = sand.u32 %s31, 1
        %s258 = scalar_lea.sflag [#allocation5], %s257
        %s259 = sand.u32 %s31, 1
        %s260 = smul.addr %s259, 128
        %s261 = scalar_lea.vmem [#allocation4], %s260
        %p262 = pneg %p44
        %p263 = pneg %p41
        %p264 = pneg %p65
        %p265 = pneg %p62
        %p266 = pneg %p86
        %p267 = pneg %p83
        %p268 = pneg %p107
        %p269 = pneg %p104
        %p270 = pneg %p128
        %p271 = pneg %p125
        %p272 = pneg %p154
        %p273 = pneg %p151
        %s274 = sand.u32 %s141, 1
        %s275 = scalar_lea.sflag [#allocation6], %s274
        %s276 = sand.u32 %s141, 1
        %s277 = smul.addr %s276, 128
        %s278 = scalar_lea.vmem [#allocation10], %s277
        %s279 = smul.u32 8, %s23
        %s280 = smul.u32 8, %s23
        %281 = vst [vmem:[#allocation2] sm:$0x1] 0.0
        %282 = vst [vmem:[#allocation2 + $0x18] sm:$0x1] 0.0
        %283 = vst [vmem:[#allocation2 + $0x30] sm:$0x1] 0.0
        %284 = vst [vmem:[#allocation2 + $0x48] sm:$0x1] 0.0
        %285 = vst [vmem:[#allocation2 + $0x60] sm:$0x1] 0.0
        %286 = vst [vmem:[#allocation2 + $0x78] sm:$0x1] 0.0
        %287 = vst [vmem:[#allocation2 + $0x90] sm:$0x1] 0.0
        %288 = vst [vmem:[#allocation2 + $0xa8] sm:$0x1] 0.0
        %289 = vst [vmem:[#allocation2 + $0x11] sm:$0x1] 0.0
        %290 = vst [vmem:[#allocation2 + $0x29] sm:$0x1] 0.0
        %291 = vst [vmem:[#allocation2 + $0x41] sm:$0x1] 0.0
        %292 = vst [vmem:[#allocation2 + $0x59] sm:$0x1] 0.0
        %293 = vst [vmem:[#allocation2 + $0x71] sm:$0x1] 0.0
        %294 = vst [vmem:[#allocation2 + $0x89] sm:$0x1] 0.0
        %295 = vst [vmem:[#allocation2 + $0xa1] sm:$0x1] 0.0
        %296 = vst [vmem:[#allocation2 + $0xb9] sm:$0x1] 0.0
        %297 = vst [vmem:[#allocation3] sm:$0x1] 0.0
        %298 = vst [vmem:[#allocation3 + $0x18] sm:$0x1] 0.0
        %299 = vst [vmem:[#allocation3 + $0x30] sm:$0x1] 0.0
        %300 = vst [vmem:[#allocation3 + $0x48] sm:$0x1] 0.0
        %301 = vst [vmem:[#allocation3 + $0x60] sm:$0x1] 0.0
        %302 = vst [vmem:[#allocation3 + $0x78] sm:$0x1] 0.0
        %303 = vst [vmem:[#allocation3 + $0x90] sm:$0x1] 0.0
        %304 = vst [vmem:[#allocation3 + $0xa8] sm:$0x1] 0.0
        %305 = vst [vmem:[#allocation3 + $0x11] sm:$0x1] 0.0
        %306 = vst [vmem:[#allocation3 + $0x29] sm:$0x1] 0.0
        %307 = vst [vmem:[#allocation3 + $0x41] sm:$0x1] 0.0
        %308 = vst [vmem:[#allocation3 + $0x59] sm:$0x1] 0.0
        %309 = vst [vmem:[#allocation3 + $0x71] sm:$0x1] 0.0
        %310 = vst [vmem:[#allocation3 + $0x89] sm:$0x1] 0.0
        %311 = vst [vmem:[#allocation3 + $0xa1] sm:$0x1] 0.0
        %312 = vst [vmem:[#allocation3 + $0xb9] sm:$0x1] 0.0
        %v313 = vld [vmem:[%s241] sm:$0xff]
        %v314 = vld [vmem:[%s241 + $0x8] sm:$0xff]
        %v315 = vld [vmem:[%s241 + $0x10] sm:$0xff]
        %v316 = vld [vmem:[%s241 + $0x18] sm:$0xff]
        %v317 = vld [vmem:[%s241 + $0x20] sm:$0xff]
        %v318 = vld [vmem:[%s241 + $0x28] sm:$0xff]
        %v319 = vld [vmem:[%s241 + $0x30] sm:$0xff]
        %v320 = vld [vmem:[%s241 + $0x38] sm:$0xff]
        %v321 = vld [vmem:[%s241 + $0x40] sm:$0xff]
        %v322 = vld [vmem:[%s241 + $0x48] sm:$0xff]
        %v323 = vld [vmem:[%s241 + $0x50] sm:$0xff]
        %v324 = vld [vmem:[%s241 + $0x58] sm:$0xff]
        %v325 = vld [vmem:[%s241 + $0x60] sm:$0xff]
        %v326 = vld [vmem:[%s241 + $0x68] sm:$0xff]
        %v327 = vld [vmem:[%s241 + $0x70] sm:$0xff]
        %v328 = vld [vmem:[%s241 + $0x78] sm:$0xff]
        %329 = vst [vmem:[#allocation2 + $0x1] sm:$0xff] %v313
        %330 = vst [vmem:[#allocation2 + $0x9] sm:$0xff] %v314
        %331 = vst [vmem:[#allocation2 + $0x19] sm:$0xff] %v315
        %332 = vst [vmem:[#allocation2 + $0x21] sm:$0xff] %v316
        %333 = vst [vmem:[#allocation2 + $0x31] sm:$0xff] %v317
        %334 = vst [vmem:[#allocation2 + $0x39] sm:$0xff] %v318
        %335 = vst [vmem:[#allocation2 + $0x49] sm:$0xff] %v319
        %336 = vst [vmem:[#allocation2 + $0x51] sm:$0xff] %v320
        %337 = vst [vmem:[#allocation2 + $0x61] sm:$0xff] %v321
        %338 = vst [vmem:[#allocation2 + $0x69] sm:$0xff] %v322
        %339 = vst [vmem:[#allocation2 + $0x79] sm:$0xff] %v323
        %340 = vst [vmem:[#allocation2 + $0x81] sm:$0xff] %v324
        %341 = vst [vmem:[#allocation2 + $0x91] sm:$0xff] %v325
        %342 = vst [vmem:[#allocation2 + $0x99] sm:$0xff] %v326
        %343 = vst [vmem:[#allocation2 + $0xa9] sm:$0xff] %v327
        %344 = vst [vmem:[#allocation2 + $0xb1] sm:$0xff] %v328
        %v345 = vld [vmem:[#allocation2] sm:$0xff]
        %v346 = vld [vmem:[#allocation2 + $0x8] sm:$0xff]
        %v347 = vld [vmem:[#allocation2 + $0x18] sm:$0xff]
        %v348 = vld [vmem:[#allocation2 + $0x20] sm:$0xff]
        %v349 = vld [vmem:[#allocation2 + $0x30] sm:$0xff]
        %v350 = vld [vmem:[#allocation2 + $0x38] sm:$0xff]
        %v351 = vld [vmem:[#allocation2 + $0x48] sm:$0xff]
        %v352 = vld [vmem:[#allocation2 + $0x50] sm:$0xff]
        %v353 = vld [vmem:[#allocation2 + $0x60] sm:$0xff]
        %v354 = vld [vmem:[#allocation2 + $0x68] sm:$0xff]
        %v355 = vld [vmem:[#allocation2 + $0x78] sm:$0xff]
        %v356 = vld [vmem:[#allocation2 + $0x80] sm:$0xff]
        %v357 = vld [vmem:[#allocation2 + $0x90] sm:$0xff]
        %v358 = vld [vmem:[#allocation2 + $0x98] sm:$0xff]
        %v359 = vld [vmem:[#allocation2 + $0xa8] sm:$0xff]
        %v360 = vld [vmem:[#allocation2 + $0xb0] sm:$0xff]
        %v361 = vld [vmem:[#allocation2 + $0x1] sm:$0xff]
        %v362 = vld [vmem:[#allocation2 + $0x9] sm:$0xff]
        %v363 = vld [vmem:[#allocation2 + $0x19] sm:$0xff]
        %v364 = vld [vmem:[#allocation2 + $0x21] sm:$0xff]
        %v365 = vld [vmem:[#allocation2 + $0x31] sm:$0xff]
        %v366 = vld [vmem:[#allocation2 + $0x39] sm:$0xff]
        %v367 = vld [vmem:[#allocation2 + $0x49] sm:$0xff]
        %v368 = vld [vmem:[#allocation2 + $0x51] sm:$0xff]
        %v369 = vld [vmem:[#allocation2 + $0x61] sm:$0xff]
        %v370 = vld [vmem:[#allocation2 + $0x69] sm:$0xff]
        %v371 = vld [vmem:[#allocation2 + $0x79] sm:$0xff]
        %v372 = vld [vmem:[#allocation2 + $0x81] sm:$0xff]
        %v373 = vld [vmem:[#allocation2 + $0x91] sm:$0xff]
        %v374 = vld [vmem:[#allocation2 + $0x99] sm:$0xff]
        %v375 = vld [vmem:[#allocation2 + $0xa9] sm:$0xff]
        %v376 = vld [vmem:[#allocation2 + $0xb1] sm:$0xff]
        %v377 = vld [vmem:[#allocation2 + $0x2] sm:$0xff]
        %v378 = vld [vmem:[#allocation2 + $0xa] sm:$0xff]
        %v379 = vld [vmem:[#allocation2 + $0x1a] sm:$0xff]
        %v380 = vld [vmem:[#allocation2 + $0x22] sm:$0xff]
        %v381 = vld [vmem:[#allocation2 + $0x32] sm:$0xff]
        %v382 = vld [vmem:[#allocation2 + $0x3a] sm:$0xff]
        %v383 = vld [vmem:[#allocation2 + $0x4a] sm:$0xff]
        %v384 = vld [vmem:[#allocation2 + $0x52] sm:$0xff]
        %v385 = vld [vmem:[#allocation2 + $0x62] sm:$0xff]
        %v386 = vld [vmem:[#allocation2 + $0x6a] sm:$0xff]
        %v387 = vld [vmem:[#allocation2 + $0x7a] sm:$0xff]
        %v388 = vld [vmem:[#allocation2 + $0x82] sm:$0xff]
        %v389 = vld [vmem:[#allocation2 + $0x92] sm:$0xff]
        %v390 = vld [vmem:[#allocation2 + $0x9a] sm:$0xff]
        %v391 = vld [vmem:[#allocation2 + $0xaa] sm:$0xff]
        %v392 = vld [vmem:[#allocation2 + $0xb2] sm:$0xff]
        %v393 = vld [vmem:[#allocation7] sm:$0xff]
        %v394 = vld [vmem:[#allocation7 + $0x8] sm:$0xff]
        %v395 = vld [vmem:[#allocation7 + $0x10] sm:$0xff]
        %v396 = vld [vmem:[#allocation7 + $0x18] sm:$0xff]
        %v397 = vld [vmem:[#allocation7 + $0x20] sm:$0xff]
        %v398 = vld [vmem:[#allocation7 + $0x28] sm:$0xff]
        %v399 = vld [vmem:[#allocation7 + $0x30] sm:$0xff]
        %v400 = vld [vmem:[#allocation7 + $0x38] sm:$0xff]
        %v401 = vld [vmem:[#allocation7 + $0x40] sm:$0xff]
        %v402 = vld [vmem:[#allocation7 + $0x48] sm:$0xff]
        %v403 = vld [vmem:[#allocation7 + $0x50] sm:$0xff]
        %v404 = vld [vmem:[#allocation7 + $0x58] sm:$0xff]
        %v405 = vld [vmem:[#allocation7 + $0x60] sm:$0xff]
        %v406 = vld [vmem:[#allocation7 + $0x68] sm:$0xff]
        %v407 = vld [vmem:[#allocation7 + $0x70] sm:$0xff]
        %v408 = vld [vmem:[#allocation7 + $0x78] sm:$0xff]
        %v409 = vld [vmem:[#allocation7 + $0x80] sm:$0xff]
        %v410 = vld [vmem:[#allocation7 + $0x88] sm:$0xff]
        %v411 = vld [vmem:[#allocation7 + $0x90] sm:$0xff]
        %v412 = vld [vmem:[#allocation7 + $0x98] sm:$0xff]
        %v413 = vld [vmem:[#allocation7 + $0xa0] sm:$0xff]
        %v414 = vld [vmem:[#allocation7 + $0xa8] sm:$0xff]
        %v415 = vld [vmem:[#allocation7 + $0xb0] sm:$0xff]
        %v416 = vld [vmem:[#allocation7 + $0xb8] sm:$0xff]
        %v417 = vld [vmem:[#allocation7 + $0xc0] sm:$0xff]
        %v418 = vld [vmem:[#allocation7 + $0xc8] sm:$0xff]
        %v419 = vld [vmem:[#allocation7 + $0xd0] sm:$0xff]
        %v420 = vld [vmem:[#allocation7 + $0xd8] sm:$0xff]
        %v421 = vld [vmem:[#allocation7 + $0xe0] sm:$0xff]
        %v422 = vld [vmem:[#allocation7 + $0xe8] sm:$0xff]
        %v423 = vld [vmem:[#allocation7 + $0xf0] sm:$0xff]
        %v424 = vld [vmem:[#allocation7 + $0xf8] sm:$0xff]
        %v425 = vld [vmem:[#allocation7 + $0x100] sm:$0xff]
        %v426 = vld [vmem:[#allocation7 + $0x108] sm:$0xff]
        %v427 = vld [vmem:[#allocation7 + $0x110] sm:$0xff]
        %v428 = vld [vmem:[#allocation7 + $0x118] sm:$0xff]
        %v429 = vld [vmem:[#allocation7 + $0x120] sm:$0xff]
        %v430 = vld [vmem:[#allocation7 + $0x128] sm:$0xff]
        %v431 = vld [vmem:[#allocation7 + $0x130] sm:$0xff]
        %v432 = vld [vmem:[#allocation7 + $0x138] sm:$0xff]
        %v433 = vld [vmem:[#allocation7 + $0x140] sm:$0xff]
        %v434 = vld [vmem:[#allocation7 + $0x148] sm:$0xff]
        %v435 = vld [vmem:[#allocation7 + $0x150] sm:$0xff]
        %v436 = vld [vmem:[#allocation7 + $0x158] sm:$0xff]
        %v437 = vld [vmem:[#allocation7 + $0x160] sm:$0xff]
        %v438 = vld [vmem:[#allocation7 + $0x168] sm:$0xff]
        %v439 = vld [vmem:[#allocation7 + $0x170] sm:$0xff]
        %v440 = vld [vmem:[#allocation7 + $0x178] sm:$0xff]
        %v441 = vld [vmem:[%s2] sm:$0x1]
        %v443 = vperm.slane %v441, 0
        %445 = vmatpush.msra.mxu0 %v408
        %446 = vmatpush.msra.mxu0 %v407
        %447 = vmatpush.msra.mxu0 %v406
        %448 = vmatpush.msra.mxu0 %v405
        %449 = vmatpush.msra.mxu0 %v404
        %450 = vmatpush.msra.mxu0 %v403
        %451 = vmatpush.msra.mxu0 %v402
        %452 = vmatpush.msra.mxu0 %v401
        %453 = vmatpush.msra.mxu0 %v400
        %454 = vmatpush.msra.mxu0 %v399
        %455 = vmatpush.msra.mxu0 %v398
        %456 = vmatpush.msra.mxu0 %v397
        %457 = vmatpush.msra.mxu0 %v396
        %458 = vmatpush.msra.mxu0 %v395
        %459 = vmatpush.msra.mxu0 %v394
        %460 = vmatpush.msra.mxu0 %v393
        %461 = vmatmul.f32.gmra.mxu0 %v345
        %v462 = vpop.f32.mrf.mxu0
        %v463 = vadd.f32 %v443, %v462
        %464 = vmatmul.f32.gmra.mxu0 %v346
        %v465 = vpop.f32.mrf.mxu0
        %v466 = vadd.f32 %v443, %v465
        %467 = vmatmul.f32.gmra.mxu0 %v347
        %v468 = vpop.f32.mrf.mxu0
        %v469 = vadd.f32 %v443, %v468
        %470 = vmatmul.f32.gmra.mxu0 %v348
        %v471 = vpop.f32.mrf.mxu0
        %v472 = vadd.f32 %v443, %v471
        %473 = vmatmul.f32.gmra.mxu0 %v349
        %v474 = vpop.f32.mrf.mxu0
        %v475 = vadd.f32 %v443, %v474
        %476 = vmatmul.f32.gmra.mxu0 %v350
        %v477 = vpop.f32.mrf.mxu0
        %v478 = vadd.f32 %v443, %v477
        %479 = vmatmul.f32.gmra.mxu0 %v351
        %v480 = vpop.f32.mrf.mxu0
        %v481 = vadd.f32 %v443, %v480
        %482 = vmatmul.f32.gmra.mxu0 %v352
        %v483 = vpop.f32.mrf.mxu0
        %v484 = vadd.f32 %v443, %v483
        %485 = vmatmul.f32.gmra.mxu0 %v353
        %v486 = vpop.f32.mrf.mxu0
        %v487 = vadd.f32 %v443, %v486
        %488 = vmatmul.f32.gmra.mxu0 %v354
        %v489 = vpop.f32.mrf.mxu0
        %v490 = vadd.f32 %v443, %v489
        %491 = vmatmul.f32.gmra.mxu0 %v355
        %v492 = vpop.f32.mrf.mxu0
        %v493 = vadd.f32 %v443, %v492
        %494 = vmatmul.f32.gmra.mxu0 %v356
        %v495 = vpop.f32.mrf.mxu0
        %v496 = vadd.f32 %v443, %v495
        %497 = vmatmul.f32.gmra.mxu0 %v357
        %v498 = vpop.f32.mrf.mxu0
        %v499 = vadd.f32 %v443, %v498
        %500 = vmatmul.f32.gmra.mxu0 %v358
        %v501 = vpop.f32.mrf.mxu0
        %v502 = vadd.f32 %v443, %v501
        %503 = vmatmul.f32.gmra.mxu0 %v359
        %v504 = vpop.f32.mrf.mxu0
        %v505 = vadd.f32 %v443, %v504
        %506 = vmatmul.f32.gmra.mxu0 %v360
        %v507 = vpop.f32.mrf.mxu0
        %v508 = vadd.f32 %v443, %v507
        %509 = vdwg.mxu0
        %510 = vmatpush.msra.mxu0 %v424
        %511 = vmatpush.msra.mxu0 %v423
        %512 = vmatpush.msra.mxu0 %v422
        %513 = vmatpush.msra.mxu0 %v421
        %514 = vmatpush.msra.mxu0 %v420
        %515 = vmatpush.msra.mxu0 %v419
        %516 = vmatpush.msra.mxu0 %v418
        %517 = vmatpush.msra.mxu0 %v417
        %518 = vmatpush.msra.mxu0 %v416
        %519 = vmatpush.msra.mxu0 %v415
        %520 = vmatpush.msra.mxu0 %v414
        %521 = vmatpush.msra.mxu0 %v413
        %522 = vmatpush.msra.mxu0 %v412
        %523 = vmatpush.msra.mxu0 %v411
        %524 = vmatpush.msra.mxu0 %v410
        %525 = vmatpush.msra.mxu0 %v409
        %526 = vmatmul.f32.gmra.mxu0 %v361
        %v527 = vpop.f32.mrf.mxu0
        %v528 = vadd.f32 %v463, %v527
        %529 = vmatmul.f32.gmra.mxu0 %v362
        %v530 = vpop.f32.mrf.mxu0
        %v531 = vadd.f32 %v466, %v530
        %532 = vmatmul.f32.gmra.mxu0 %v363
        %v533 = vpop.f32.mrf.mxu0
        %v534 = vadd.f32 %v469, %v533
        %535 = vmatmul.f32.gmra.mxu0 %v364
        %v536 = vpop.f32.mrf.mxu0
        %v537 = vadd.f32 %v472, %v536
        %538 = vmatmul.f32.gmra.mxu0 %v365
        %v539 = vpop.f32.mrf.mxu0
        %v540 = vadd.f32 %v475, %v539
        %541 = vmatmul.f32.gmra.mxu0 %v366
        %v542 = vpop.f32.mrf.mxu0
        %v543 = vadd.f32 %v478, %v542
        %544 = vmatmul.f32.gmra.mxu0 %v367
        %v545 = vpop.f32.mrf.mxu0
        %v546 = vadd.f32 %v481, %v545
        %547 = vmatmul.f32.gmra.mxu0 %v368
        %v548 = vpop.f32.mrf.mxu0
        %v549 = vadd.f32 %v484, %v548
        %550 = vmatmul.f32.gmra.mxu0 %v369
        %v551 = vpop.f32.mrf.mxu0
        %v552 = vadd.f32 %v487, %v551
        %553 = vmatmul.f32.gmra.mxu0 %v370
        %v554 = vpop.f32.mrf.mxu0
        %v555 = vadd.f32 %v490, %v554
        %556 = vmatmul.f32.gmra.mxu0 %v371
        %v557 = vpop.f32.mrf.mxu0
        %v558 = vadd.f32 %v493, %v557
        %559 = vmatmul.f32.gmra.mxu0 %v372
        %v560 = vpop.f32.mrf.mxu0
        %v561 = vadd.f32 %v496, %v560
        %562 = vmatmul.f32.gmra.mxu0 %v373
        %v563 = vpop.f32.mrf.mxu0
        %v564 = vadd.f32 %v499, %v563
        %565 = vmatmul.f32.gmra.mxu0 %v374
        %v566 = vpop.f32.mrf.mxu0
        %v567 = vadd.f32 %v502, %v566
        %568 = vmatmul.f32.gmra.mxu0 %v375
        %v569 = vpop.f32.mrf.mxu0
        %v570 = vadd.f32 %v505, %v569
        %571 = vmatmul.f32.gmra.mxu0 %v376
        %v572 = vpop.f32.mrf.mxu0
        %v573 = vadd.f32 %v508, %v572
        %574 = vdwg.mxu0
        %575 = vmatpush.msra.mxu0 %v440
        %576 = vmatpush.msra.mxu0 %v439
        %577 = vmatpush.msra.mxu0 %v438
        %578 = vmatpush.msra.mxu0 %v437
        %579 = vmatpush.msra.mxu0 %v436
        %580 = vmatpush.msra.mxu0 %v435
        %581 = vmatpush.msra.mxu0 %v434
        %582 = vmatpush.msra.mxu0 %v433
        %583 = vmatpush.msra.mxu0 %v432
        %584 = vmatpush.msra.mxu0 %v431
        %585 = vmatpush.msra.mxu0 %v430
        %586 = vmatpush.msra.mxu0 %v429
        %587 = vmatpush.msra.mxu0 %v428
        %588 = vmatpush.msra.mxu0 %v427
        %589 = vmatpush.msra.mxu0 %v426
        %590 = vmatpush.msra.mxu0 %v425
        %591 = vmatmul.f32.gmra.mxu0 %v377
        %v592 = vpop.f32.mrf.mxu0
        %v593 = vadd.f32 %v528, %v592
        %594 = vmatmul.f32.gmra.mxu0 %v378
        %v595 = vpop.f32.mrf.mxu0
        %v596 = vadd.f32 %v531, %v595
        %597 = vmatmul.f32.gmra.mxu0 %v379
        %v598 = vpop.f32.mrf.mxu0
        %v599 = vadd.f32 %v534, %v598
        %600 = vmatmul.f32.gmra.mxu0 %v380
        %v601 = vpop.f32.mrf.mxu0
        %v602 = vadd.f32 %v537, %v601
        %603 = vmatmul.f32.gmra.mxu0 %v381
        %v604 = vpop.f32.mrf.mxu0
        %v605 = vadd.f32 %v540, %v604
        %606 = vmatmul.f32.gmra.mxu0 %v382
        %v607 = vpop.f32.mrf.mxu0
        %v608 = vadd.f32 %v543, %v607
        %609 = vmatmul.f32.gmra.mxu0 %v383
        %v610 = vpop.f32.mrf.mxu0
        %v611 = vadd.f32 %v546, %v610
        %612 = vmatmul.f32.gmra.mxu0 %v384
        %v613 = vpop.f32.mrf.mxu0
        %v614 = vadd.f32 %v549, %v613
        %615 = vmatmul.f32.gmra.mxu0 %v385
        %v616 = vpop.f32.mrf.mxu0
        %v617 = vadd.f32 %v552, %v616
        %618 = vmatmul.f32.gmra.mxu0 %v386
        %v619 = vpop.f32.mrf.mxu0
        %v620 = vadd.f32 %v555, %v619
        %621 = vmatmul.f32.gmra.mxu0 %v387
        %v622 = vpop.f32.mrf.mxu0
        %v623 = vadd.f32 %v558, %v622
        %624 = vmatmul.f32.gmra.mxu0 %v388
        %v625 = vpop.f32.mrf.mxu0
        %v626 = vadd.f32 %v561, %v625
        %627 = vmatmul.f32.gmra.mxu0 %v389
        %v628 = vpop.f32.mrf.mxu0
        %v629 = vadd.f32 %v564, %v628
        %630 = vmatmul.f32.gmra.mxu0 %v390
        %v631 = vpop.f32.mrf.mxu0
        %v632 = vadd.f32 %v567, %v631
        %633 = vmatmul.f32.gmra.mxu0 %v391
        %v634 = vpop.f32.mrf.mxu0
        %v635 = vadd.f32 %v570, %v634
        %636 = vmatmul.f32.gmra.mxu0 %v392
        %v637 = vpop.f32.mrf.mxu0
        %v638 = vadd.f32 %v573, %v637
        %639 = vdwg.mxu0
        %v640 = vmax.f32 %v593, 0.0
        %v641 = vmax.f32 %v596, 0.0
        %v642 = vmax.f32 %v599, 0.0
        %v643 = vmax.f32 %v602, 0.0
        %v644 = vmax.f32 %v605, 0.0
        %v645 = vmax.f32 %v608, 0.0
        %v646 = vmax.f32 %v611, 0.0
        %v647 = vmax.f32 %v614, 0.0
        %v648 = vmax.f32 %v617, 0.0
        %v649 = vmax.f32 %v620, 0.0
        %v650 = vmax.f32 %v623, 0.0
        %v651 = vmax.f32 %v626, 0.0
        %v652 = vmax.f32 %v629, 0.0
        %v653 = vmax.f32 %v632, 0.0
        %v654 = vmax.f32 %v635, 0.0
        %v655 = vmax.f32 %v638, 0.0
        %656 = vst [vmem:[#allocation3 + $0x1] sm:$0xff] %v640
        %657 = vst [vmem:[#allocation3 + $0x9] sm:$0xff] %v641
        %658 = vst [vmem:[#allocation3 + $0x19] sm:$0xff] %v642
        %659 = vst [vmem:[#allocation3 + $0x21] sm:$0xff] %v643
        %660 = vst [vmem:[#allocation3 + $0x31] sm:$0xff] %v644
        %661 = vst [vmem:[#allocation3 + $0x39] sm:$0xff] %v645
        %662 = vst [vmem:[#allocation3 + $0x49] sm:$0xff] %v646
        %663 = vst [vmem:[#allocation3 + $0x51] sm:$0xff] %v647
        %664 = vst [vmem:[#allocation3 + $0x61] sm:$0xff] %v648
        %665 = vst [vmem:[#allocation3 + $0x69] sm:$0xff] %v649
        %666 = vst [vmem:[#allocation3 + $0x79] sm:$0xff] %v650
        %667 = vst [vmem:[#allocation3 + $0x81] sm:$0xff] %v651
        %668 = vst [vmem:[#allocation3 + $0x91] sm:$0xff] %v652
        %669 = vst [vmem:[#allocation3 + $0x99] sm:$0xff] %v653
        %670 = vst [vmem:[#allocation3 + $0xa9] sm:$0xff] %v654
        %671 = vst [vmem:[#allocation3 + $0xb1] sm:$0xff] %v655
        %v672 = vld [vmem:[#allocation3] sm:$0xff]
        %v673 = vld [vmem:[#allocation3 + $0x8] sm:$0xff]
        %v674 = vld [vmem:[#allocation3 + $0x18] sm:$0xff]
        %v675 = vld [vmem:[#allocation3 + $0x20] sm:$0xff]
        %v676 = vld [vmem:[#allocation3 + $0x30] sm:$0xff]
        %v677 = vld [vmem:[#allocation3 + $0x38] sm:$0xff]
        %v678 = vld [vmem:[#allocation3 + $0x48] sm:$0xff]
        %v679 = vld [vmem:[#allocation3 + $0x50] sm:$0xff]
        %v680 = vld [vmem:[#allocation3 + $0x60] sm:$0xff]
        %v681 = vld [vmem:[#allocation3 + $0x68] sm:$0xff]
        %v682 = vld [vmem:[#allocation3 + $0x78] sm:$0xff]
        %v683 = vld [vmem:[#allocation3 + $0x80] sm:$0xff]
        %v684 = vld [vmem:[#allocation3 + $0x90] sm:$0xff]
        %v685 = vld [vmem:[#allocation3 + $0x98] sm:$0xff]
        %v686 = vld [vmem:[#allocation3 + $0xa8] sm:$0xff]
        %v687 = vld [vmem:[#allocation3 + $0xb0] sm:$0xff]
        %v688 = vld [vmem:[#allocation3 + $0x1] sm:$0xff]
        %v689 = vld [vmem:[#allocation3 + $0x9] sm:$0xff]
        %v690 = vld [vmem:[#allocation3 + $0x19] sm:$0xff]
        %v691 = vld [vmem:[#allocation3 + $0x21] sm:$0xff]
        %v692 = vld [vmem:[#allocation3 + $0x31] sm:$0xff]
        %v693 = vld [vmem:[#allocation3 + $0x39] sm:$0xff]
        %v694 = vld [vmem:[#allocation3 + $0x49] sm:$0xff]
        %v695 = vld [vmem:[#allocation3 + $0x51] sm:$0xff]
        %v696 = vld [vmem:[#allocation3 + $0x61] sm:$0xff]
        %v697 = vld [vmem:[#allocation3 + $0x69] sm:$0xff]
        %v698 = vld [vmem:[#allocation3 + $0x79] sm:$0xff]
        %v699 = vld [vmem:[#allocation3 + $0x81] sm:$0xff]
        %v700 = vld [vmem:[#allocation3 + $0x91] sm:$0xff]
        %v701 = vld [vmem:[#allocation3 + $0x99] sm:$0xff]
        %v702 = vld [vmem:[#allocation3 + $0xa9] sm:$0xff]
        %v703 = vld [vmem:[#allocation3 + $0xb1] sm:$0xff]
        %v704 = vld [vmem:[#allocation3 + $0x2] sm:$0xff]
        %v705 = vld [vmem:[#allocation3 + $0xa] sm:$0xff]
        %v706 = vld [vmem:[#allocation3 + $0x1a] sm:$0xff]
        %v707 = vld [vmem:[#allocation3 + $0x22] sm:$0xff]
        %v708 = vld [vmem:[#allocation3 + $0x32] sm:$0xff]
        %v709 = vld [vmem:[#allocation3 + $0x3a] sm:$0xff]
        %v710 = vld [vmem:[#allocation3 + $0x4a] sm:$0xff]
        %v711 = vld [vmem:[#allocation3 + $0x52] sm:$0xff]
        %v712 = vld [vmem:[#allocation3 + $0x62] sm:$0xff]
        %v713 = vld [vmem:[#allocation3 + $0x6a] sm:$0xff]
        %v714 = vld [vmem:[#allocation3 + $0x7a] sm:$0xff]
        %v715 = vld [vmem:[#allocation3 + $0x82] sm:$0xff]
        %v716 = vld [vmem:[#allocation3 + $0x92] sm:$0xff]
        %v717 = vld [vmem:[#allocation3 + $0x9a] sm:$0xff]
        %v718 = vld [vmem:[#allocation3 + $0xaa] sm:$0xff]
        %v719 = vld [vmem:[#allocation3 + $0xb2] sm:$0xff]
        %v720 = vld [vmem:[#allocation9] sm:$0xff]
        %v721 = vld [vmem:[#allocation9 + $0x8] sm:$0xff]
        %v722 = vld [vmem:[#allocation9 + $0x10] sm:$0xff]
        %v723 = vld [vmem:[#allocation9 + $0x18] sm:$0xff]
        %v724 = vld [vmem:[#allocation9 + $0x20] sm:$0xff]
        %v725 = vld [vmem:[#allocation9 + $0x28] sm:$0xff]
        %v726 = vld [vmem:[#allocation9 + $0x30] sm:$0xff]
        %v727 = vld [vmem:[#allocation9 + $0x38] sm:$0xff]
        %v728 = vld [vmem:[#allocation9 + $0x40] sm:$0xff]
        %v729 = vld [vmem:[#allocation9 + $0x48] sm:$0xff]
        %v730 = vld [vmem:[#allocation9 + $0x50] sm:$0xff]
        %v731 = vld [vmem:[#allocation9 + $0x58] sm:$0xff]
        %v732 = vld [vmem:[#allocation9 + $0x60] sm:$0xff]
        %v733 = vld [vmem:[#allocation9 + $0x68] sm:$0xff]
        %v734 = vld [vmem:[#allocation9 + $0x70] sm:$0xff]
        %v735 = vld [vmem:[#allocation9 + $0x78] sm:$0xff]
        %v736 = vld [vmem:[#allocation9 + $0x80] sm:$0xff]
        %v737 = vld [vmem:[#allocation9 + $0x88] sm:$0xff]
        %v738 = vld [vmem:[#allocation9 + $0x90] sm:$0xff]
        %v739 = vld [vmem:[#allocation9 + $0x98] sm:$0xff]
        %v740 = vld [vmem:[#allocation9 + $0xa0] sm:$0xff]
        %v741 = vld [vmem:[#allocation9 + $0xa8] sm:$0xff]
        %v742 = vld [vmem:[#allocation9 + $0xb0] sm:$0xff]
        %v743 = vld [vmem:[#allocation9 + $0xb8] sm:$0xff]
        %v744 = vld [vmem:[#allocation9 + $0xc0] sm:$0xff]
        %v745 = vld [vmem:[#allocation9 + $0xc8] sm:$0xff]
        %v746 = vld [vmem:[#allocation9 + $0xd0] sm:$0xff]
        %v747 = vld [vmem:[#allocation9 + $0xd8] sm:$0xff]
        %v748 = vld [vmem:[#allocation9 + $0xe0] sm:$0xff]
        %v749 = vld [vmem:[#allocation9 + $0xe8] sm:$0xff]
        %v750 = vld [vmem:[#allocation9 + $0xf0] sm:$0xff]
        %v751 = vld [vmem:[#allocation9 + $0xf8] sm:$0xff]
        %v752 = vld [vmem:[#allocation9 + $0x100] sm:$0xff]
        %v753 = vld [vmem:[#allocation9 + $0x108] sm:$0xff]
        %v754 = vld [vmem:[#allocation9 + $0x110] sm:$0xff]
        %v755 = vld [vmem:[#allocation9 + $0x118] sm:$0xff]
        %v756 = vld [vmem:[#allocation9 + $0x120] sm:$0xff]
        %v757 = vld [vmem:[#allocation9 + $0x128] sm:$0xff]
        %v758 = vld [vmem:[#allocation9 + $0x130] sm:$0xff]
        %v759 = vld [vmem:[#allocation9 + $0x138] sm:$0xff]
        %v760 = vld [vmem:[#allocation9 + $0x140] sm:$0xff]
        %v761 = vld [vmem:[#allocation9 + $0x148] sm:$0xff]
        %v762 = vld [vmem:[#allocation9 + $0x150] sm:$0xff]
        %v763 = vld [vmem:[#allocation9 + $0x158] sm:$0xff]
        %v764 = vld [vmem:[#allocation9 + $0x160] sm:$0xff]
        %v765 = vld [vmem:[#allocation9 + $0x168] sm:$0xff]
        %v766 = vld [vmem:[#allocation9 + $0x170] sm:$0xff]
        %v767 = vld [vmem:[#allocation9 + $0x178] sm:$0xff]
        %v768 = vld [vmem:[%s4] sm:$0x1]
        %v770 = vperm.slane %v768, 0
        %772 = vmatpush.msra.mxu0 %v735
        %773 = vmatpush.msra.mxu0 %v734
        %774 = vmatpush.msra.mxu0 %v733
        %775 = vmatpush.msra.mxu0 %v732
        %776 = vmatpush.msra.mxu0 %v731
        %777 = vmatpush.msra.mxu0 %v730
        %778 = vmatpush.msra.mxu0 %v729
        %779 = vmatpush.msra.mxu0 %v728
        %780 = vmatpush.msra.mxu0 %v727
        %781 = vmatpush.msra.mxu0 %v726
        %782 = vmatpush.msra.mxu0 %v725
        %783 = vmatpush.msra.mxu0 %v724
        %784 = vmatpush.msra.mxu0 %v723
        %785 = vmatpush.msra.mxu0 %v722
        %786 = vmatpush.msra.mxu0 %v721
        %787 = vmatpush.msra.mxu0 %v720
        %788 = vmatmul.f32.gmra.mxu0 %v672
        %v789 = vpop.f32.mrf.mxu0
        %v790 = vadd.f32 %v770, %v789
        %791 = vmatmul.f32.gmra.mxu0 %v673
        %v792 = vpop.f32.mrf.mxu0
        %v793 = vadd.f32 %v770, %v792
        %794 = vmatmul.f32.gmra.mxu0 %v674
        %v795 = vpop.f32.mrf.mxu0
        %v796 = vadd.f32 %v770, %v795
        %797 = vmatmul.f32.gmra.mxu0 %v675
        %v798 = vpop.f32.mrf.mxu0
        %v799 = vadd.f32 %v770, %v798
        %800 = vmatmul.f32.gmra.mxu0 %v676
        %v801 = vpop.f32.mrf.mxu0
        %v802 = vadd.f32 %v770, %v801
        %803 = vmatmul.f32.gmra.mxu0 %v677
        %v804 = vpop.f32.mrf.mxu0
        %v805 = vadd.f32 %v770, %v804
        %806 = vmatmul.f32.gmra.mxu0 %v678
        %v807 = vpop.f32.mrf.mxu0
        %v808 = vadd.f32 %v770, %v807
        %809 = vmatmul.f32.gmra.mxu0 %v679
        %v810 = vpop.f32.mrf.mxu0
        %v811 = vadd.f32 %v770, %v810
        %812 = vmatmul.f32.gmra.mxu0 %v680
        %v813 = vpop.f32.mrf.mxu0
        %v814 = vadd.f32 %v770, %v813
        %815 = vmatmul.f32.gmra.mxu0 %v681
        %v816 = vpop.f32.mrf.mxu0
        %v817 = vadd.f32 %v770, %v816
        %818 = vmatmul.f32.gmra.mxu0 %v682
        %v819 = vpop.f32.mrf.mxu0
        %v820 = vadd.f32 %v770, %v819
        %821 = vmatmul.f32.gmra.mxu0 %v683
        %v822 = vpop.f32.mrf.mxu0
        %v823 = vadd.f32 %v770, %v822
        %824 = vmatmul.f32.gmra.mxu0 %v684
        %v825 = vpop.f32.mrf.mxu0
        %v826 = vadd.f32 %v770, %v825
        %827 = vmatmul.f32.gmra.mxu0 %v685
        %v828 = vpop.f32.mrf.mxu0
        %v829 = vadd.f32 %v770, %v828
        %830 = vmatmul.f32.gmra.mxu0 %v686
        %v831 = vpop.f32.mrf.mxu0
        %v832 = vadd.f32 %v770, %v831
        %833 = vmatmul.f32.gmra.mxu0 %v687
        %v834 = vpop.f32.mrf.mxu0
        %v835 = vadd.f32 %v770, %v834
        %836 = vdwg.mxu0
        %837 = vmatpush.msra.mxu0 %v751
        %838 = vmatpush.msra.mxu0 %v750
        %839 = vmatpush.msra.mxu0 %v749
        %840 = vmatpush.msra.mxu0 %v748
        %841 = vmatpush.msra.mxu0 %v747
        %842 = vmatpush.msra.mxu0 %v746
        %843 = vmatpush.msra.mxu0 %v745
        %844 = vmatpush.msra.mxu0 %v744
        %845 = vmatpush.msra.mxu0 %v743
        %846 = vmatpush.msra.mxu0 %v742
        %847 = vmatpush.msra.mxu0 %v741
        %848 = vmatpush.msra.mxu0 %v740
        %849 = vmatpush.msra.mxu0 %v739
        %850 = vmatpush.msra.mxu0 %v738
        %851 = vmatpush.msra.mxu0 %v737
        %852 = vmatpush.msra.mxu0 %v736
        %853 = vmatmul.f32.gmra.mxu0 %v688
        %v854 = vpop.f32.mrf.mxu0
        %v855 = vadd.f32 %v790, %v854
        %856 = vmatmul.f32.gmra.mxu0 %v689
        %v857 = vpop.f32.mrf.mxu0
        %v858 = vadd.f32 %v793, %v857
        %859 = vmatmul.f32.gmra.mxu0 %v690
        %v860 = vpop.f32.mrf.mxu0
        %v861 = vadd.f32 %v796, %v860
        %862 = vmatmul.f32.gmra.mxu0 %v691
        %v863 = vpop.f32.mrf.mxu0
        %v864 = vadd.f32 %v799, %v863
        %865 = vmatmul.f32.gmra.mxu0 %v692
        %v866 = vpop.f32.mrf.mxu0
        %v867 = vadd.f32 %v802, %v866
        %868 = vmatmul.f32.gmra.mxu0 %v693
        %v869 = vpop.f32.mrf.mxu0
        %v870 = vadd.f32 %v805, %v869
        %871 = vmatmul.f32.gmra.mxu0 %v694
        %v872 = vpop.f32.mrf.mxu0
        %v873 = vadd.f32 %v808, %v872
        %874 = vmatmul.f32.gmra.mxu0 %v695
        %v875 = vpop.f32.mrf.mxu0
        %v876 = vadd.f32 %v811, %v875
        %877 = vmatmul.f32.gmra.mxu0 %v696
        %v878 = vpop.f32.mrf.mxu0
        %v879 = vadd.f32 %v814, %v878
        %880 = vmatmul.f32.gmra.mxu0 %v697
        %v881 = vpop.f32.mrf.mxu0
        %v882 = vadd.f32 %v817, %v881
        %883 = vmatmul.f32.gmra.mxu0 %v698
        %v884 = vpop.f32.mrf.mxu0
        %v885 = vadd.f32 %v820, %v884
        %886 = vmatmul.f32.gmra.mxu0 %v699
        %v887 = vpop.f32.mrf.mxu0
        %v888 = vadd.f32 %v823, %v887
        %889 = vmatmul.f32.gmra.mxu0 %v700
        %v890 = vpop.f32.mrf.mxu0
        %v891 = vadd.f32 %v826, %v890
        %892 = vmatmul.f32.gmra.mxu0 %v701
        %v893 = vpop.f32.mrf.mxu0
        %v894 = vadd.f32 %v829, %v893
        %895 = vmatmul.f32.gmra.mxu0 %v702
        %v896 = vpop.f32.mrf.mxu0
        %v897 = vadd.f32 %v832, %v896
        %898 = vmatmul.f32.gmra.mxu0 %v703
        %v899 = vpop.f32.mrf.mxu0
        %v900 = vadd.f32 %v835, %v899
        %901 = vdwg.mxu0
        %902 = vmatpush.msra.mxu0 %v767
        %903 = vmatpush.msra.mxu0 %v766
        %904 = vmatpush.msra.mxu0 %v765
        %905 = vmatpush.msra.mxu0 %v764
        %906 = vmatpush.msra.mxu0 %v763
        %907 = vmatpush.msra.mxu0 %v762
        %908 = vmatpush.msra.mxu0 %v761
        %909 = vmatpush.msra.mxu0 %v760
        %910 = vmatpush.msra.mxu0 %v759
        %911 = vmatpush.msra.mxu0 %v758
        %912 = vmatpush.msra.mxu0 %v757
        %913 = vmatpush.msra.mxu0 %v756
        %914 = vmatpush.msra.mxu0 %v755
        %915 = vmatpush.msra.mxu0 %v754
        %916 = vmatpush.msra.mxu0 %v753
        %917 = vmatpush.msra.mxu0 %v752
        %918 = vmatmul.f32.gmra.mxu0 %v704
        %v919 = vpop.f32.mrf.mxu0
        %v920 = vadd.f32 %v855, %v919
        %921 = vmatmul.f32.gmra.mxu0 %v705
        %v922 = vpop.f32.mrf.mxu0
        %v923 = vadd.f32 %v858, %v922
        %924 = vmatmul.f32.gmra.mxu0 %v706
        %v925 = vpop.f32.mrf.mxu0
        %v926 = vadd.f32 %v861, %v925
        %927 = vmatmul.f32.gmra.mxu0 %v707
        %v928 = vpop.f32.mrf.mxu0
        %v929 = vadd.f32 %v864, %v928
        %930 = vmatmul.f32.gmra.mxu0 %v708
        %v931 = vpop.f32.mrf.mxu0
        %v932 = vadd.f32 %v867, %v931
        %933 = vmatmul.f32.gmra.mxu0 %v709
        %v934 = vpop.f32.mrf.mxu0
        %v935 = vadd.f32 %v870, %v934
        %936 = vmatmul.f32.gmra.mxu0 %v710
        %v937 = vpop.f32.mrf.mxu0
        %v938 = vadd.f32 %v873, %v937
        %939 = vmatmul.f32.gmra.mxu0 %v711
        %v940 = vpop.f32.mrf.mxu0
        %v941 = vadd.f32 %v876, %v940
        %942 = vmatmul.f32.gmra.mxu0 %v712
        %v943 = vpop.f32.mrf.mxu0
        %v944 = vadd.f32 %v879, %v943
        %945 = vmatmul.f32.gmra.mxu0 %v713
        %v946 = vpop.f32.mrf.mxu0
        %v947 = vadd.f32 %v882, %v946
        %948 = vmatmul.f32.gmra.mxu0 %v714
        %v949 = vpop.f32.mrf.mxu0
        %v950 = vadd.f32 %v885, %v949
        %951 = vmatmul.f32.gmra.mxu0 %v715
        %v952 = vpop.f32.mrf.mxu0
        %v953 = vadd.f32 %v888, %v952
        %954 = vmatmul.f32.gmra.mxu0 %v716
        %v955 = vpop.f32.mrf.mxu0
        %v956 = vadd.f32 %v891, %v955
        %957 = vmatmul.f32.gmra.mxu0 %v717
        %v958 = vpop.f32.mrf.mxu0
        %v959 = vadd.f32 %v894, %v958
        %960 = vmatmul.f32.gmra.mxu0 %v718
        %v961 = vpop.f32.mrf.mxu0
        %v962 = vadd.f32 %v897, %v961
        %963 = vmatmul.f32.gmra.mxu0 %v719
        %v964 = vpop.f32.mrf.mxu0
        %v965 = vadd.f32 %v900, %v964
        %966 = vdwg.mxu0
        %v967 = vld [vmem:[%s241] sm:$0xff]
        %v968 = vld [vmem:[%s241 + $0x8] sm:$0xff]
        %v969 = vld [vmem:[%s241 + $0x10] sm:$0xff]
        %v970 = vld [vmem:[%s241 + $0x18] sm:$0xff]
        %v971 = vld [vmem:[%s241 + $0x20] sm:$0xff]
        %v972 = vld [vmem:[%s241 + $0x28] sm:$0xff]
        %v973 = vld [vmem:[%s241 + $0x30] sm:$0xff]
        %v974 = vld [vmem:[%s241 + $0x38] sm:$0xff]
        %v975 = vld [vmem:[%s241 + $0x40] sm:$0xff]
        %v976 = vld [vmem:[%s241 + $0x48] sm:$0xff]
        %v977 = vld [vmem:[%s241 + $0x50] sm:$0xff]
        %v978 = vld [vmem:[%s241 + $0x58] sm:$0xff]
        %v979 = vld [vmem:[%s241 + $0x60] sm:$0xff]
        %v980 = vld [vmem:[%s241 + $0x68] sm:$0xff]
        %v981 = vld [vmem:[%s241 + $0x70] sm:$0xff]
        %v982 = vld [vmem:[%s241 + $0x78] sm:$0xff]
        %v983 = vadd.f32 %v920, %v967
        %v984 = vadd.f32 %v923, %v968
        %v985 = vadd.f32 %v926, %v969
        %v986 = vadd.f32 %v929, %v970
        %v987 = vadd.f32 %v932, %v971
        %v988 = vadd.f32 %v935, %v972
        %v989 = vadd.f32 %v938, %v973
        %v990 = vadd.f32 %v941, %v974
        %v991 = vadd.f32 %v944, %v975
        %v992 = vadd.f32 %v947, %v976
        %v993 = vadd.f32 %v950, %v977
        %v994 = vadd.f32 %v953, %v978
        %v995 = vadd.f32 %v956, %v979
        %v996 = vadd.f32 %v959, %v980
        %v997 = vadd.f32 %v962, %v981
        %v998 = vadd.f32 %v965, %v982
        %v999 = vmax.f32 %v983, 0.0
        %v1000 = vmax.f32 %v984, 0.0
        %v1001 = vmax.f32 %v985, 0.0
        %v1002 = vmax.f32 %v986, 0.0
        %v1003 = vmax.f32 %v987, 0.0
        %v1004 = vmax.f32 %v988, 0.0
        %v1005 = vmax.f32 %v989, 0.0
        %v1006 = vmax.f32 %v990, 0.0
        %v1007 = vmax.f32 %v991, 0.0
        %v1008 = vmax.f32 %v992, 0.0
        %v1009 = vmax.f32 %v993, 0.0
        %v1010 = vmax.f32 %v994, 0.0
        %v1011 = vmax.f32 %v995, 0.0
        %v1012 = vmax.f32 %v996, 0.0
        %v1013 = vmax.f32 %v997, 0.0
        %v1014 = vmax.f32 %v998, 0.0
        %1015 = vst [vmem:[%s278] sm:$0xff] %v999
        %1016 = vst [vmem:[%s278 + $0x8] sm:$0xff] %v1000
        %1017 = vst [vmem:[%s278 + $0x10] sm:$0xff] %v1001
        %1018 = vst [vmem:[%s278 + $0x18] sm:$0xff] %v1002
        %1019 = vst [vmem:[%s278 + $0x20] sm:$0xff] %v1003
        %1020 = vst [vmem:[%s278 + $0x28] sm:$0xff] %v1004
        %1021 = vst [vmem:[%s278 + $0x30] sm:$0xff] %v1005
        %1022 = vst [vmem:[%s278 + $0x38] sm:$0xff] %v1006
        %1023 = vst [vmem:[%s278 + $0x40] sm:$0xff] %v1007
        %1024 = vst [vmem:[%s278 + $0x48] sm:$0xff] %v1008
        %1025 = vst [vmem:[%s278 + $0x50] sm:$0xff] %v1009
        %1026 = vst [vmem:[%s278 + $0x58] sm:$0xff] %v1010
        %1027 = vst [vmem:[%s278 + $0x60] sm:$0xff] %v1011
        %1028 = vst [vmem:[%s278 + $0x68] sm:$0xff] %v1012
        %1029 = vst [vmem:[%s278 + $0x70] sm:$0xff] %v1013
        %1030 = vst [vmem:[%s278 + $0x78] sm:$0xff] %v1014
        %s1031 = sand.u32 %s141, 1
        %s1032 = scalar_lea.sflag [#allocation6], %s1031
        %s1033 = sand.u32 %s141, 1
        %s1034 = smul.addr %s1033, 128
        %s1035 = scalar_lea.vmem [#allocation10], %s1034
        // Predicated region
        $region53: #{tpu_custom_call.1} parent=39 // pred_check
          %p1036 = pneg %p151
        $region54: #{tpu_custom_call.1} parent=39 // pred_check_branch
          %1038 = sbr.rel (%p1036) target = $region56
        $region55: #{tpu_custom_call.1} parent=39 // pred_region
          %s1039 = smul.u32 8, %s23
          %1041 = vsyncadd %s1032, 0
          %s1042 = smul.addr %s1039, 2
          %s1043 = smul.addr %s1042, 8
          %s1044 = scalar_lea.hbm %s5, %s1043
          %s1045 = sshll.u32 %s1035, 4
          %s1046 = int_to_ptr.vmem [resolvable:$true] %s1045
          %s1047 = sshll.u32 %s1044, 4
          %s1048 = int_to_ptr.hbm [resolvable:$true] %s1047
          %1053 = dma.vmem_to_hbm [thread:$0]  %s1046, 2048, %s1048, %s1032, 128, 128, 8
        $region56: #{tpu_custom_call.1} parent=39 // pred_fallthru
          _
      $region40: #{tpu_custom_call.1} parent=5 // pred_fallthru
        _
      %p1054 = scmp.le.s32.totalorder 2, %s18
      // Predicated region
      $region57: #{tpu_custom_call.1} parent=5 // pred_check
        %p1055 = pneg %p1054
      $region58: #{tpu_custom_call.1} parent=5 // pred_check_branch
        %1057 = sbr.rel (%p1055) target = $region60
      $region59: #{tpu_custom_call.1} parent=5 // pred_region
        %s1058 = ssub.s32 %s18, 2
        // Predicated region
        $region61: #{tpu_custom_call.1} parent=59 // pred_check
          %p1059 = pneg %p157
        $region62: #{tpu_custom_call.1} parent=59 // pred_check_branch
          %1061 = sbr.rel (%p1059) target = $region64
        $region63: #{tpu_custom_call.1} parent=59 // pred_region
          %s1062 = sand.u32 %s142, 1
          %s1063 = scalar_lea.sflag [#allocation6], %s1062
          %s1064 = sand.u32 %s142, 1
          %s1065 = smul.addr %s1064, 128
          %s1066 = scalar_lea.vmem [#allocation10], %s1065
          %1068 = dma.done %s1063, 2048
        $region64: #{tpu_custom_call.1} parent=59 // pred_fallthru
          _
      $region60: #{tpu_custom_call.1} parent=5 // pred_fallthru
        _
    $region6: #{tpu_custom_call.1} parent=1 // loop_footer
      %s22 = sadd.s32 1, %s18
    $region7: #{tpu_custom_call.1} parent=1 // loop_footer_branch
      %17 = sbr.rel target = $region3
    $region8: #{tpu_custom_call.1} parent=1 // loop_exit
      _
    %1069 = vsyncpa [#allocation5], 1
    %s1070 = scalar_lea.sflag [#allocation5], 1
    %1071 = vsyncpa %s1070, 1
    %1072 = vsyncpa [#allocation8], 1
    %1073 = vsyncpa [#allocation6], 1
    %s1074 = scalar_lea.sflag [#allocation6], 1
    %1075 = vsyncpa %s1074, 1

</llo_original>
